<compile_context>
chip_gen: v7x
topology: tpu7x:2x2x1
jax: 0.10.0
libtpu: 0.0.40
codegen_flags: <defaults>
</compile_context>

<pallas_src>
import math

import jax
import jax.numpy as jnp
from jax.experimental import pallas as pl
from jax.experimental.pallas import tpu as pltpu

LANE = 128
SUBLANE = 8
_CHUNK = SUBLANE * LANE  # 1024 elements

# Keep live pipeline buffers (2 inputs x 2 buffers x tile) comfortably under
# v5e's 16 MiB default scoped-VMEM limit; measured elementwise kernels gain
# little past ~4 MiB/step (85% -> 86% of HBM roofline), so don't chase more.
_MAX_LIVE_BYTES = 12 * 1024 * 1024


def _tensorcores_per_device():
    """Best-effort TensorCores-per-device count. Returns (count, detected)."""
    try:
        info = pltpu.get_tpu_info()
        for attr in ("num_cores", "core_count", "num_tensorcores",
                     "tensorcores_per_chip", "num_cores_per_chip"):
            v = getattr(info, attr, None)
            if isinstance(v, int) and 1 <= v <= 8:
                return v, True
    except Exception:
        pass
    try:
        v = getattr(jax.devices()[0], "num_cores", None)
        if isinstance(v, int) and 1 <= v <= 8:
            return v, True
    except Exception:
        pass
    # Unknown: 2 partitions are near-free on 1-TC chips and let a 2-TC chip
    # split the HBM stream.
    return 2, False


def _make_kernel(bru, rows, bpp, may_need_mask):
    """bru: rows per block (multiple of 8); rows: true row count (static)."""

    def fold(d):
        # Fold into one (8,128) vreg accumulator: leading-axis sum is pure
        # VPU elementwise adds (no XLU traffic in the hot loop).
        dd = d * d
        return jnp.sum(dd.reshape(bru // SUBLANE, SUBLANE, LANE), axis=0)

    def kernel(x_ref, y_ref, o_ref, acc_ref):
        p = pl.program_id(0)
        i = pl.program_id(1)
        ni = pl.num_programs(1)

        @pl.when(i == 0)
        def _():
            acc_ref[...] = jnp.zeros_like(acc_ref)

        # UNCLAMPED logical block index -> true row offset.  Clamped duplicate
        # blocks (odd nblocks on the 2nd partition) land fully past `rows`.
        row0 = (p * bpp + i) * bru

        if may_need_mask:
            in_bounds = row0 + bru <= rows

            # Fast path: no iota / compare / select — keeps VALU at the
            # minimum 3 ops/vreg (matters on v7x where VALU is near-binding).
            @pl.when(in_bounds)
            def _():
                d = x_ref[...].astype(jnp.float32) - y_ref[...].astype(jnp.float32)
                acc_ref[...] += fold(d)

            # Masked path: ragged last block / clamped duplicate blocks only.
            @pl.when(jnp.logical_not(in_bounds))
            def _():
                d = x_ref[...].astype(jnp.float32) - y_ref[...].astype(jnp.float32)
                row_ids = row0 + jax.lax.broadcasted_iota(jnp.int32, (bru, LANE), 0)
                # Mask BEFORE squaring so OOB-read garbage (unchecked on TPU)
                # never reaches the accumulator.
                d = jnp.where(row_ids < rows, d, 0.0)
                acc_ref[...] += fold(d)
        else:
            d = x_ref[...].astype(jnp.float32) - y_ref[...].astype(jnp.float32)
            acc_ref[...] += fold(d)

        @pl.when(i == ni - 1)
        def _():
            o_ref[...] = jnp.sum(acc_ref[...]).reshape(1, 1)

    return kernel


def lab_loss(inp, tgt, *, block_rows=None, num_parts=None, core_parallel=False):
    """Equivalent of F.mse_loss(input, target, reduction='sum')."""
    assert inp.shape == tgt.shape, (inp.shape, tgt.shape)
    n = int(math.prod(inp.shape))

    xf = jnp.ravel(inp)
    yf = jnp.ravel(tgt)

    # Tiny inputs: a kernel launch isn't worth it.
    if n < _CHUNK:
        d = xf.astype(jnp.float32) - yf.astype(jnp.float32)
        return jnp.sum(d * d)

    # Lane-align WITHOUT jnp.pad (which would copy both inputs through HBM):
    # run the kernel on the 128-aligned prefix (ragged rows are masked
    # in-kernel) and fold the <128-element tail in with a tiny XLA reduction.
    # TODO(synk): verify XLA lowers the offset-0 prefix slice to an alias
    # rather than a copy; if not, fall back to element-granular in-kernel mask.
    aligned = n - (n % LANE)
    tail = jnp.float32(0.0)
    if aligned != n:
        dt = xf[aligned:].astype(jnp.float32) - yf[aligned:].astype(jnp.float32)
        tail = jnp.sum(dt * dt)
        xf = xf[:aligned]
        yf = yf[:aligned]

    rows = aligned // LANE
    x2 = xf.reshape(rows, LANE)
    y2 = yf.reshape(rows, LANE)

    itemsize = jnp.dtype(inp.dtype).itemsize

    # Tile: default ~2 MiB per input per step regardless of dtype, capped so
    # live double-buffered inputs stay under the v5e scoped-VMEM default.
    if block_rows is None:
        block_rows = 4096 * 4 // itemsize
    vmem_cap = _MAX_LIVE_BYTES // (2 * 2 * LANE * itemsize)
    bru = min(int(block_rows), int(vmem_cap), rows)
    bru = max(SUBLANE, (bru // SUBLANE) * SUBLANE)

    nblocks = pl.cdiv(rows, bru)

    if num_parts is None:
        cores, detected = _tensorcores_per_device()
        num_parts = cores if detected else 2
    num_parts = max(1, min(int(num_parts), nblocks))

    bpp = pl.cdiv(nblocks, num_parts)  # inner blocks per partition
    # Any logical block extending past the true row extent needs the mask.
    may_need_mask = num_parts * bpp * bru > rows

    kernel = _make_kernel(bru, rows, bpp, may_need_mask)

    # Clamp the block index so out-of-range blocks (odd nblocks) re-read the
    # last block; the in-kernel row mask zeroes their contribution.
    def idx_map(p, i):
        return (jnp.minimum(p * bpp + i, nblocks - 1), 0)

    # On v7x, pass core_parallel=True if xprof shows one TensorCore idle with
    # plain "parallel" semantics.
    axis0 = pltpu.CORE_PARALLEL if core_parallel else "parallel"

    cost = pl.CostEstimate(
        flops=3 * n,
        transcendentals=0,
        bytes_accessed=2 * aligned * itemsize + num_parts * 4,
    )

    out = pl.pallas_call(
        kernel,
        out_shape=jax.ShapeDtypeStruct((num_parts, 1), jnp.float32),
        grid_spec=pltpu.PrefetchScalarGridSpec(
            num_scalar_prefetch=0,
            grid=(num_parts, bpp),
            in_specs=[
                pl.BlockSpec((bru, LANE), idx_map),
                pl.BlockSpec((bru, LANE), idx_map),
            ],
            out_specs=pl.BlockSpec((1, 1), lambda p, i: (p, 0)),
            scratch_shapes=[pltpu.VMEM((SUBLANE, LANE), jnp.float32)],
        ),
        compiler_params=pltpu.CompilerParams(
            dimension_semantics=(axis0, "arbitrary"),
        ),
        cost_estimate=cost,
    )(x2, y2)

    return jnp.sum(out) + tail


if __name__ == "__main__":
    key = jax.random.PRNGKey(0)
    k1, k2, k3, k4, k5, k6 = jax.random.split(key, 6)

    # Small NCHW shapes consistent with an image color (Lab) loss.
    x = jax.random.normal(k1, (2, 4, 16, 16), dtype=jnp.float32)
    y = jax.random.normal(k2, (2, 4, 16, 16), dtype=jnp.float32)
    loss = jax.block_until_ready(lab_loss(x, y))
    ref = jnp.sum((x - y) ** 2)
    assert jnp.allclose(loss, ref, rtol=1e-5, atol=1e-4), (loss, ref)

    # Ragged case: multi-block, masked tail rows, two-partition path.
    a = jax.random.normal(k3, (2, 3, 40, 40), dtype=jnp.float32)
    b = jax.random.normal(k4, (2, 3, 40, 40), dtype=jnp.float32)
    loss2 = jax.block_until_ready(lab_loss(a, b, block_rows=16))
    ref2 = jnp.sum((a - b) ** 2)
    assert jnp.allclose(loss2, ref2, rtol=1e-5, atol=1e-3), (loss2, ref2)

    # Element count not a multiple of 128: exercises the XLA tail fold.
    c = jax.random.normal(k5, (2, 4, 11, 13), dtype=jnp.float32)
    d = jax.random.normal(k6, (2, 4, 11, 13), dtype=jnp.float32)
    loss3 = jax.block_until_ready(lab_loss(c, d))
    ref3 = jnp.sum((c - d) ** 2)
    assert jnp.allclose(loss3, ref3, rtol=1e-5, atol=1e-3), (loss3, ref3)

    print("KERNEL_OK")
</pallas_src>

<mosaic_0001>
module attributes {stable_mosaic.version = 11 : i64} {
  func.func @kernel(%arg0: i32, %arg1: i32, %arg2: memref<16x128xf32, #tpu.memory_space<vmem>>, %arg3: memref<16x128xf32, #tpu.memory_space<vmem>>, %arg4: memref<1x1xf32, #tpu.memory_space<vmem>>, %arg5: memref<8x128xf32, #tpu.memory_space<vmem>>) attributes {dimension_semantics = [#tpu.dimension_semantics<parallel>, #tpu.dimension_semantics<arbitrary>], iteration_bounds = array<i64: 1, 1>, scalar_prefetch = 0 : i64, scratch_operands = 1 : i64, tpu.core_type = #tpu.core_type<tc>, window_params = [{transform_indices = @transform_0, window_bounds = array<i64: 16, 128>}, {transform_indices = @transform_1, window_bounds = array<i64: 16, 128>}, {transform_indices = @transform_2, window_bounds = array<i64: 1, 1>}]} {
    %c0_i32 = arith.constant 0 : i32
    %0 = arith.cmpi eq, %arg1, %c0_i32 : i32
    %1 = arith.extui %0 : i1 to i32
    %c0_i32_0 = arith.constant 0 : i32
    %2 = arith.cmpi ne, %1, %c0_i32_0 : i32
    scf.if %2 {
      %cst_10 = arith.constant 0.000000e+00 : f32
      %15 = vector.broadcast %cst_10 : f32 to vector<8x128xf32>
      %c0_11 = arith.constant 0 : index
      %c0_12 = arith.constant 0 : index
      %16 = vector.load %arg5[%c0_11, %c0_12] : memref<8x128xf32, #tpu.memory_space<vmem>>, vector<8x128xf32>
      tpu.vector_store %arg5[%c0_11, %c0_12], %15 {strides = array<i32>} : memref<8x128xf32, #tpu.memory_space<vmem>>, vector<8x128xf32>,
    } else {
    }
    %c0 = arith.constant 0 : index
    %c0_1 = arith.constant 0 : index
    %3 = vector.load %arg2[%c0, %c0_1] : memref<16x128xf32, #tpu.memory_space<vmem>>, vector<16x128xf32>
    %c0_2 = arith.constant 0 : index
    %c0_3 = arith.constant 0 : index
    %4 = vector.load %arg3[%c0_2, %c0_3] : memref<16x128xf32, #tpu.memory_space<vmem>>, vector<16x128xf32>
    %5 = arith.subf %3, %4 : vector<16x128xf32>
    %c0_4 = arith.constant 0 : index
    %c0_5 = arith.constant 0 : index
    %6 = vector.load %arg5[%c0_4, %c0_5] : memref<8x128xf32, #tpu.memory_space<vmem>>, vector<8x128xf32>
    %7 = arith.mulf %5, %5 : vector<16x128xf32>
    %8 = vector.shape_cast %7 : vector<16x128xf32> to vector<2x8x128xf32>
    %cst = arith.constant dense<0.000000e+00> : vector<8x128xf32>
    %9 = vector.multi_reduction <add>, %8, %cst [0] : vector<2x8x128xf32> to vector<8x128xf32>
    %10 = arith.addf %6, %9 : vector<8x128xf32>
    %c0_6 = arith.constant 0 : index
    %c0_7 = arith.constant 0 : index
    %11 = vector.load %arg5[%c0_6, %c0_7] : memref<8x128xf32, #tpu.memory_space<vmem>>, vector<8x128xf32>
    tpu.vector_store %arg5[%c0_6, %c0_7], %10 {strides = array<i32>} : memref<8x128xf32, #tpu.memory_space<vmem>>, vector<8x128xf32>,
    %c0_i32_8 = arith.constant 0 : i32
    %12 = arith.cmpi eq, %arg1, %c0_i32_8 : i32
    %13 = arith.extui %12 : i1 to i32
    %c0_i32_9 = arith.constant 0 : i32
    %14 = arith.cmpi ne, %13, %c0_i32_9 : i32
    scf.if %14 {
      %c0_10 = arith.constant 0 : index
      %c0_11 = arith.constant 0 : index
      %15 = vector.load %arg5[%c0_10, %c0_11] : memref<8x128xf32, #tpu.memory_space<vmem>>, vector<8x128xf32>
      %16 = vector.shape_cast %15 : vector<8x128xf32> to vector<1x8x128xf32>
      %cst_12 = arith.constant dense<0.000000e+00> : vector<1xf32>
      %17 = vector.multi_reduction <add>, %16, %cst_12 [1, 2] : vector<1x8x128xf32> to vector<1xf32>
      %18 = vector.shape_cast %17 : vector<1xf32> to vector<1x1x1xf32>
      %19 = vector.extract %18[0, 0, 0] : f32 from vector<1x1x1xf32>
      %20 = vector.broadcast %19 : f32 to vector<1x1xf32>
      %c0_13 = arith.constant 0 : index
      %c0_14 = arith.constant 0 : index
      %21 = vector.load %arg4[%c0_13, %c0_14] : memref<1x1xf32, #tpu.memory_space<vmem>>, vector<1x1xf32>
      tpu.vector_store %arg4[%c0_13, %c0_14], %20 {strides = array<i32>} : memref<1x1xf32, #tpu.memory_space<vmem>>, vector<1x1xf32>,
    } else {
    }
    return
  }
  func.func @transform_0(%arg0: i32, %arg1: i32) -> (i32, i32) {
    %c1_i32 = arith.constant 1 : i32
    %0 = arith.muli %arg0, %c1_i32 : i32
    %1 = arith.addi %0, %arg1 : i32
    %c0_i32 = arith.constant 0 : i32
    %2 = arith.minsi %1, %c0_i32 : i32
    %c0_i32_0 = arith.constant 0 : i32
    %c0_i32_1 = arith.constant 0 : i32
    return %2, %c0_i32_0 : i32, i32
  }
  func.func @transform_1(%arg0: i32, %arg1: i32) -> (i32, i32) {
    %c1_i32 = arith.constant 1 : i32
    %0 = arith.muli %arg0, %c1_i32 : i32
    %1 = arith.addi %0, %arg1 : i32
    %c0_i32 = arith.constant 0 : i32
    %2 = arith.minsi %1, %c0_i32 : i32
    %c0_i32_0 = arith.constant 0 : i32
    %c0_i32_1 = arith.constant 0 : i32
    return %2, %c0_i32_0 : i32, i32
  }
  func.func @transform_2(%arg0: i32, %arg1: i32) -> (i32, i32) {
    %c0_i32 = arith.constant 0 : i32
    %c0_i32_0 = arith.constant 0 : i32
    return %arg0, %c0_i32 : i32, i32
  }
}

</mosaic_0001>

<llo_original>
// kernel: tpu_custom_call.1
$region0: #{tpu_custom_call.1}
  #allocation0 [shape = 'u32[]', space=smem, size = 0x4, offset = 0x4, fixed_abs, tag = 'smem constant byte address 0x4 - core index']
  #allocation1 [shape = 'u32[144,128]{1,0:T(1,128)}', space=vmem, size = 0x12000, scoped, tag = 'internal scratch']
  #allocation2 [shape = 'f32[8,128]{1,0:T(8,128)}', space=vmem, size = 0x1000, scoped, tag = 'scratch operand']
  %s0 = inlined_call_operand.hbm [shape: f32[16,128], index: 0, kind: input, shape index: {}]
  %s1 = inlined_call_operand.hbm [shape: f32[16,128], index: 1, kind: input, shape index: {}]
  %s2 = inlined_call_operand.hbm [shape: f32[1,1], index: 2, kind: output, shape index: {}]
  %s3 = sld [smem:[#allocation0]]
  $region34: #{tpu_custom_call.1} parent=0
    _
  %s5 = ssub.s32 1, %s3
  %s6 = scalar_select 0, %s5, %s3
  $region1: #{tpu_custom_call.1} parent=0
    #allocation3 [shape = 'u8[8192]{0}', space=vmem, size = 0x2000, scoped, tag = 'input window, operand 0, single buffered']
    #allocation4 [shape = 's32[1]{0}', space=sflag, size = 0x4, scoped, tag = 'scoped memory for tpu_custom_call.1']
    #allocation5 [shape = 's32[1]{0}', space=sflag, size = 0x4, scoped, tag = 'scoped memory for tpu_custom_call.1']
    #allocation6 [shape = 'u8[8192]{0}', space=vmem, size = 0x2000, scoped, tag = 'input window, operand 1, single buffered']
    #allocation7 [shape = 's32[1]{0}', space=sflag, size = 0x4, scoped, tag = 'scoped memory for tpu_custom_call.1']
    #allocation8 [shape = 'u8[512]{0}', space=vmem, size = 0x400, scoped, tag = 'output window, operand 0, single buffered']
    %7 = vsyncpa [#allocation4], 0
    %8 = vsyncpa [#allocation7], 0
    %9 = vsyncpa [#allocation5], 0
    // Predicated region
    $region2: #{tpu_custom_call.1} parent=1 // pred_check
      _
    $region3: #{tpu_custom_call.1} parent=1 // pred_check_branch
      %11 = sbr.rel (0) target = $region5
    $region4: #{tpu_custom_call.1} parent=1 // pred_region
      %s12 = sadd.s32 0, 0
      %p13 = scmp.lt.s32.totalorder %s12, 0
      %s14 = scalar_select %p13, %s12, 0
      %s15 = smul.u32 2, %s14
      %s17 = ssub.s32 256, 256
      %18 = vsyncadd [#allocation4], %s17
      %s19 = smul.addr %s15, 128
      %s20 = scalar_lea.hbm %s0, %s19
      %s21 = sshll.u32 [#allocation3], 4
      %s22 = int_to_ptr.vmem [resolvable:$true] %s21
      %27 = dma.hbm_to_vmem [thread:$0]  %s20, 256, %s22, [#allocation4], 128, 128, 8
    $region5: #{tpu_custom_call.1} parent=1 // pred_fallthru
      _
    // Predicated region
    $region6: #{tpu_custom_call.1} parent=1 // pred_check
      _
    $region7: #{tpu_custom_call.1} parent=1 // pred_check_branch
      %29 = sbr.rel (0) target = $region9
    $region8: #{tpu_custom_call.1} parent=1 // pred_region
      %s30 = sadd.s32 0, 0
      %p31 = scmp.lt.s32.totalorder %s30, 0
      %s32 = scalar_select %p31, %s30, 0
      %s33 = smul.u32 2, %s32
      %s35 = ssub.s32 256, 256
      %36 = vsyncadd [#allocation7], %s35
      %s37 = smul.addr %s33, 128
      %s38 = scalar_lea.hbm %s1, %s37
      %s39 = sshll.u32 [#allocation6], 4
      %s40 = int_to_ptr.vmem [resolvable:$true] %s39
      %45 = dma.hbm_to_vmem [thread:$0]  %s38, 256, %s40, [#allocation7], 128, 128, 8
    $region9: #{tpu_custom_call.1} parent=1 // pred_fallthru
      _
    // Predicated region
    $region10: #{tpu_custom_call.1} parent=1 // pred_check
      _
    $region11: #{tpu_custom_call.1} parent=1 // pred_check_branch
      %47 = sbr.rel (0) target = $region13
    $region12: #{tpu_custom_call.1} parent=1 // pred_region
      %48 = dma.done [#allocation4], 256
    $region13: #{tpu_custom_call.1} parent=1 // pred_fallthru
      _
    // Predicated region
    $region14: #{tpu_custom_call.1} parent=1 // pred_check
      _
    $region15: #{tpu_custom_call.1} parent=1 // pred_check_branch
      %50 = sbr.rel (0) target = $region17
    $region16: #{tpu_custom_call.1} parent=1 // pred_region
      %51 = dma.done [#allocation7], 256
    $region17: #{tpu_custom_call.1} parent=1 // pred_fallthru
      _
    %s52 = sadd.s32 0, 0
    %p53 = scmp.lt.s32.totalorder %s52, 0
    %s54 = scalar_select %p53, %s52, 0
    %s55 = smul.u32 2, %s54
    %s56 = sadd.s32 0, 0
    %p57 = scmp.lt.s32.totalorder %s56, 0
    %s58 = scalar_select %p57, %s56, 0
    %s59 = smul.u32 2, %s58
    %p60 = scmp.eq.s32.totalorder 0, 0
    // Predicated region
    $region18: #{tpu_custom_call.1} parent=1 // pred_check
      %p61 = pneg %p60
    $region19: #{tpu_custom_call.1} parent=1 // pred_check_branch
      %63 = sbr.rel (%p61) target = $region21
    $region20: #{tpu_custom_call.1} parent=1 // pred_region
      %64 = vst [vmem:[#allocation2] sm:$0xff] 0.0
    $region21: #{tpu_custom_call.1} parent=1 // pred_fallthru
      _
    %v65 = vld [vmem:[#allocation3] sm:$0xff]
    %v66 = vld [vmem:[#allocation3 + $0x8] sm:$0xff]
    %v67 = vld [vmem:[#allocation6] sm:$0xff]
    %v68 = vld [vmem:[#allocation6 + $0x8] sm:$0xff]
    %v69 = vsub.f32 %v65, %v67
    %v70 = vsub.f32 %v66, %v68
    %v71 = vld [vmem:[#allocation2] sm:$0xff]
    %v72 = vmul.f32 %v69, %v69
    %v73 = vmul.f32 %v70, %v70
    %v74 = vadd.f32 %v72, %v73
    %v75 = vadd.f32 %v71, %v74
    %76 = vst [vmem:[#allocation2] sm:$0xff] %v75
    // Predicated region
    $region22: #{tpu_custom_call.1} parent=1 // pred_check
      %p77 = pneg %p60
    $region23: #{tpu_custom_call.1} parent=1 // pred_check_branch
      %79 = sbr.rel (%p77) target = $region25
    $region24: #{tpu_custom_call.1} parent=1 // pred_region
      %v80 = vld [vmem:[#allocation2] sm:$0xff]
      %81 = vadd.xlane.f32.xlu0 %v80
      %v82 = vpop.xlane.xlu0 %81
      %v83 = vrot.slane %v82, 4
      %v84 = vadd.f32 %v82, %v83
      %v85 = vrot.slane %v84, 2
      %v86 = vadd.f32 %v84, %v85
      %v87 = vrot.slane %v86, 1
      %v88 = vadd.f32 %v86, %v87
      %s89 = vtos %v88
      %v90 = vstv %s89
      %vm91 = vcmask 0
      %92 = vst.msk [vmem:[#allocation8] sm:$0x1] %vm91, %v90
    $region25: #{tpu_custom_call.1} parent=1 // pred_fallthru
      _
    // Predicated region
    $region26: #{tpu_custom_call.1} parent=1 // pred_check
      _
    $region27: #{tpu_custom_call.1} parent=1 // pred_check_branch
      %94 = sbr.rel (0) target = $region29
    $region28: #{tpu_custom_call.1} parent=1 // pred_region
      %s96 = ssub.s32 16, 16
      %97 = vsyncadd [#allocation5], %s96
      %s99 = sshll.u32 [#allocation8], 4
      %s100 = int_to_ptr.vmem [resolvable:$true] %s99
      %102 = dma.vmem_to_hbm [thread:$0]  %s100, 16, %s2, [#allocation5]
    $region29: #{tpu_custom_call.1} parent=1 // pred_fallthru
      _
    // Predicated region
    $region30: #{tpu_custom_call.1} parent=1 // pred_check
      _
    $region31: #{tpu_custom_call.1} parent=1 // pred_check_branch
      %104 = sbr.rel (0) target = $region33
    $region32: #{tpu_custom_call.1} parent=1 // pred_region
      %105 = dma.done [#allocation5], 16
    $region33: #{tpu_custom_call.1} parent=1 // pred_fallthru
      _
    %106 = vsyncpa [#allocation4], 1
    %107 = vsyncpa [#allocation7], 1
    %108 = vsyncpa [#allocation5], 1

</llo_original>
